<compile_context>
chip_gen: v5e
topology: v5e:2x2
jax: 0.10.0
libtpu: 0.0.40
codegen_flags: <defaults>
</compile_context>

<pallas_src>
import jax
import jax.numpy as jnp
from jax.experimental import pallas as pl
from jax.experimental.pallas import tpu as pltpu


LAYER_SIZES = (2, 32, 32, 32, 1)   # config.layer_sizes[0]
TILE_N = 512                       # batch tile (lanes per grid step)


def _mlp_kernel(x_ref,
                w1_ref, b1_ref,
                w2_ref, b2_ref,
                w3_ref, b3_ref,
                w4_ref, b4_ref,
                o_ref):
    # Activations are (features, TILE_N): batch lives in the 128-wide lane dim.
    x = x_ref[...]                                    # (2, TILE_N)
    w1 = w1_ref[...]                                  # (H, 2)

    # Layer 1, K=2: two VPU broadcast-FMAs (no MXU pass needed).
    h = jnp.tanh(w1[:, 0:1] * x[0:1, :]
                 + w1[:, 1:2] * x[1:2, :]
                 + b1_ref[...])                       # (H, TILE_N)

    # Hidden layers: (H, H) @ (H, TILE_N) on the MXU, tanh on VPU/EUP.
    h = jnp.tanh(jnp.dot(w2_ref[...], h, preferred_element_type=jnp.float32)
                 + b2_ref[...])
    h = jnp.tanh(jnp.dot(w3_ref[...], h, preferred_element_type=jnp.float32)
                 + b3_ref[...])

    # Output layer: (1, H) @ (H, TILE_N) -> lane-dense (1, TILE_N) block.
    out = jnp.dot(w4_ref[...], h, preferred_element_type=jnp.float32) + b4_ref[...]
    o_ref[...] = out.astype(o_ref.dtype)


def burgers_forward(x, params, tile_n=TILE_N):
    """BurgersNet.forward(x) == self._u(x).  x: (N, 2) float32 -> (N, 1) float32."""
    N, din = x.shape
    assert din == LAYER_SIZES[0]
    (w1, b1), (w2, b2), (w3, b3), (w4, b4) = params

    # Batch-in-lanes layout; pad N up to a TILE_N multiple (wrapper-side plumbing).
    n_pad = pl.cdiv(N, tile_n) * tile_n
    x_t = x.T                                         # (2, N)
    if n_pad != N:
        x_t = jnp.pad(x_t, ((0, 0), (0, n_pad - N)))

    def full_spec(shape):
        # small weight/bias tensors: whole array as one block, same every step
        return pl.BlockSpec(shape, lambda i: (0,) * len(shape))

    grid = (n_pad // tile_n,)
    out = pl.pallas_call(
        _mlp_kernel,
        out_shape=jax.ShapeDtypeStruct((LAYER_SIZES[-1], n_pad), jnp.float32),
        grid_spec=pltpu.PrefetchScalarGridSpec(
            num_scalar_prefetch=0,
            grid=grid,
            in_specs=[
                pl.BlockSpec((din, tile_n), lambda i: (0, i)),
                full_spec(w1.shape), full_spec(b1.shape),
                full_spec(w2.shape), full_spec(b2.shape),
                full_spec(w3.shape), full_spec(b3.shape),
                full_spec(w4.shape), full_spec(b4.shape),
            ],
            out_specs=pl.BlockSpec((LAYER_SIZES[-1], tile_n), lambda i: (0, i)),
        ),
        compiler_params=pltpu.CompilerParams(
            dimension_semantics=("parallel",)),
    )(x_t, w1, b1, w2, b2, w3, b3, w4, b4)

    # (1, n_pad) -> (N, 1)
    return out[:, :N].reshape(N, 1)


def init_params(key):
    """Deterministic init matching torch.nn.Linear: W is (out, in), b is (out, 1)."""
    params = []
    for idx, (fan_in, fan_out) in enumerate(zip(LAYER_SIZES[:-1], LAYER_SIZES[1:])):
        kw, kb, key = jax.random.split(jax.random.fold_in(key, idx), 3)
        bound = 1.0 / jnp.sqrt(jnp.float32(fan_in))
        w = jax.random.uniform(kw, (fan_out, fan_in), jnp.float32, -bound, bound)
        b = jax.random.uniform(kb, (fan_out, 1), jnp.float32, -bound, bound)
        params.append((w, b))
    return params


def reference_forward(x, params):
    h = x
    for i, (w, b) in enumerate(params):
        h = h @ w.T + b.reshape(1, -1)
        if i < len(params) - 1:
            h = jnp.tanh(h)
    return h


if __name__ == "__main__":
    key = jax.random.PRNGKey(0)
    params = init_params(key)

    # collocation points (t, x): N = 1024 rows, 2 columns -> 2 parallel grid steps
    kx = jax.random.fold_in(key, 1234)
    x = jax.random.uniform(kx, (1024, 2), jnp.float32, -1.0, 1.0)

    u = burgers_forward(x, params)
    u = jax.block_until_ready(u)

    u_ref = reference_forward(x, params)
    assert u.shape == (1024, 1)
    assert jnp.allclose(u, u_ref, atol=1e-5, rtol=1e-5), "mismatch vs pure-JAX reference"

    # TODO(synk): interior_loss/init_loss/bc_loss (jacrev-based PDE residuals) are
    # training-time losses, not part of forward(); not implemented as kernels here.
    print("KERNEL_OK")
</pallas_src>

<mosaic_0001>
module attributes {stable_mosaic.version = 11 : i64} {
  func.func @_mlp_kernel(%arg0: i32, %arg1: memref<2x512xf32, #tpu.memory_space<vmem>>, %arg2: memref<32x2xf32, #tpu.memory_space<vmem>>, %arg3: memref<32x1xf32, #tpu.memory_space<vmem>>, %arg4: memref<32x32xf32, #tpu.memory_space<vmem>>, %arg5: memref<32x1xf32, #tpu.memory_space<vmem>>, %arg6: memref<32x32xf32, #tpu.memory_space<vmem>>, %arg7: memref<32x1xf32, #tpu.memory_space<vmem>>, %arg8: memref<1x32xf32, #tpu.memory_space<vmem>>, %arg9: memref<1x1xf32, #tpu.memory_space<vmem>>, %arg10: memref<1x512xf32, #tpu.memory_space<vmem>>) attributes {dimension_semantics = [#tpu.dimension_semantics<parallel>], iteration_bounds = array<i64: 2>, scalar_prefetch = 0 : i64, scratch_operands = 0 : i64, tpu.core_type = #tpu.core_type<tc>, window_params = [{transform_indices = @transform_0, window_bounds = array<i64: 2, 512>}, {pipeline_mode = #tpu.pipeline_mode<synchronous>, transform_indices = @transform_1, window_bounds = array<i64: 32, 2>}, {pipeline_mode = #tpu.pipeline_mode<synchronous>, transform_indices = @transform_2, window_bounds = array<i64: 32, 1>}, {pipeline_mode = #tpu.pipeline_mode<synchronous>, transform_indices = @transform_3, window_bounds = array<i64: 32, 32>}, {pipeline_mode = #tpu.pipeline_mode<synchronous>, transform_indices = @transform_4, window_bounds = array<i64: 32, 1>}, {pipeline_mode = #tpu.pipeline_mode<synchronous>, transform_indices = @transform_5, window_bounds = array<i64: 32, 32>}, {pipeline_mode = #tpu.pipeline_mode<synchronous>, transform_indices = @transform_6, window_bounds = array<i64: 32, 1>}, {pipeline_mode = #tpu.pipeline_mode<synchronous>, transform_indices = @transform_7, window_bounds = array<i64: 1, 32>}, {pipeline_mode = #tpu.pipeline_mode<synchronous>, transform_indices = @transform_8, window_bounds = array<i64: 1, 1>}, {transform_indices = @transform_9, window_bounds = array<i64: 1, 512>}]} {
    %c0 = arith.constant 0 : index
    %c0_0 = arith.constant 0 : index
    %0 = vector.load %arg1[%c0, %c0_0] : memref<2x512xf32, #tpu.memory_space<vmem>>, vector<2x512xf32>
    %c0_1 = arith.constant 0 : index
    %c0_2 = arith.constant 0 : index
    %1 = vector.load %arg2[%c0_1, %c0_2] : memref<32x2xf32, #tpu.memory_space<vmem>>, vector<32x2xf32>
    %2 = vector.extract_strided_slice %1 {offsets = [0, 0], sizes = [32, 1], strides = [1, 1]} : vector<32x2xf32> to vector<32x1xf32>
    %3 = vector.extract_strided_slice %0 {offsets = [0, 0], sizes = [1, 512], strides = [1, 1]} : vector<2x512xf32> to vector<1x512xf32>
    %4 = vector.broadcast %2 : vector<32x1xf32> to vector<32x512xf32>
    %5 = vector.broadcast %3 : vector<1x512xf32> to vector<32x512xf32>
    %6 = arith.mulf %4, %5 : vector<32x512xf32>
    %7 = vector.extract_strided_slice %1 {offsets = [0, 1], sizes = [32, 1], strides = [1, 1]} : vector<32x2xf32> to vector<32x1xf32>
    %8 = vector.extract_strided_slice %0 {offsets = [1, 0], sizes = [1, 512], strides = [1, 1]} : vector<2x512xf32> to vector<1x512xf32>
    %9 = vector.broadcast %7 : vector<32x1xf32> to vector<32x512xf32>
    %10 = vector.broadcast %8 : vector<1x512xf32> to vector<32x512xf32>
    %11 = arith.mulf %9, %10 : vector<32x512xf32>
    %12 = arith.addf %6, %11 : vector<32x512xf32>
    %c0_3 = arith.constant 0 : index
    %c0_4 = arith.constant 0 : index
    %13 = vector.load %arg3[%c0_3, %c0_4] : memref<32x1xf32, #tpu.memory_space<vmem>>, vector<32x1xf32>
    %14 = vector.broadcast %13 : vector<32x1xf32> to vector<32x512xf32>
    %15 = arith.addf %12, %14 : vector<32x512xf32>
    %16 = math.tanh %15 : vector<32x512xf32>
    %c0_5 = arith.constant 0 : index
    %c0_6 = arith.constant 0 : index
    %17 = vector.load %arg4[%c0_5, %c0_6] : memref<32x32xf32, #tpu.memory_space<vmem>>, vector<32x32xf32>
    %cst = arith.constant dense<0.000000e+00> : vector<32x512xf32>
    %18 = tpu.matmul %17, %16, %cst {dimension_numbers = #tpu.dot_dimension_numbers<[1], [0], [0], [1], [0, 0, 1, 1], [], []>} : vector<32x32xf32>, vector<32x512xf32>, vector<32x512xf32> -> vector<32x512xf32>
    %c0_7 = arith.constant 0 : index
    %c0_8 = arith.constant 0 : index
    %19 = vector.load %arg5[%c0_7, %c0_8] : memref<32x1xf32, #tpu.memory_space<vmem>>, vector<32x1xf32>
    %20 = vector.broadcast %19 : vector<32x1xf32> to vector<32x512xf32>
    %21 = arith.addf %18, %20 : vector<32x512xf32>
    %22 = math.tanh %21 : vector<32x512xf32>
    %c0_9 = arith.constant 0 : index
    %c0_10 = arith.constant 0 : index
    %23 = vector.load %arg6[%c0_9, %c0_10] : memref<32x32xf32, #tpu.memory_space<vmem>>, vector<32x32xf32>
    %cst_11 = arith.constant dense<0.000000e+00> : vector<32x512xf32>
    %24 = tpu.matmul %23, %22, %cst_11 {dimension_numbers = #tpu.dot_dimension_numbers<[1], [0], [0], [1], [0, 0, 1, 1], [], []>} : vector<32x32xf32>, vector<32x512xf32>, vector<32x512xf32> -> vector<32x512xf32>
    %c0_12 = arith.constant 0 : index
    %c0_13 = arith.constant 0 : index
    %25 = vector.load %arg7[%c0_12, %c0_13] : memref<32x1xf32, #tpu.memory_space<vmem>>, vector<32x1xf32>
    %26 = vector.broadcast %25 : vector<32x1xf32> to vector<32x512xf32>
    %27 = arith.addf %24, %26 : vector<32x512xf32>
    %28 = math.tanh %27 : vector<32x512xf32>
    %c0_14 = arith.constant 0 : index
    %c0_15 = arith.constant 0 : index
    %29 = vector.load %arg8[%c0_14, %c0_15] : memref<1x32xf32, #tpu.memory_space<vmem>>, vector<1x32xf32>
    %cst_16 = arith.constant dense<0.000000e+00> : vector<1x512xf32>
    %30 = tpu.matmul %29, %28, %cst_16 {dimension_numbers = #tpu.dot_dimension_numbers<[1], [0], [0], [1], [0, 0, 1, 1], [], []>} : vector<1x32xf32>, vector<32x512xf32>, vector<1x512xf32> -> vector<1x512xf32>
    %c0_17 = arith.constant 0 : index
    %c0_18 = arith.constant 0 : index
    %31 = vector.load %arg9[%c0_17, %c0_18] : memref<1x1xf32, #tpu.memory_space<vmem>>, vector<1x1xf32>
    %32 = vector.broadcast %31 : vector<1x1xf32> to vector<1x512xf32>
    %33 = arith.addf %30, %32 : vector<1x512xf32>
    %c0_19 = arith.constant 0 : index
    %c0_20 = arith.constant 0 : index
    %34 = vector.load %arg10[%c0_19, %c0_20] : memref<1x512xf32, #tpu.memory_space<vmem>>, vector<1x512xf32>
    tpu.vector_store %arg10[%c0_19, %c0_20], %33 {strides = array<i32>} : memref<1x512xf32, #tpu.memory_space<vmem>>, vector<1x512xf32>,
    return
  }
  func.func @transform_0(%arg0: i32) -> (i32, i32) {
    %c0_i32 = arith.constant 0 : i32
    %c0_i32_0 = arith.constant 0 : i32
    return %c0_i32, %arg0 : i32, i32
  }
  func.func @transform_1(%arg0: i32) -> (i32, i32) {
    %c0_i32 = arith.constant 0 : i32
    %c0_i32_0 = arith.constant 0 : i32
    %c0_i32_1 = arith.constant 0 : i32
    return %c0_i32, %c0_i32_0 : i32, i32
  }
  func.func @transform_2(%arg0: i32) -> (i32, i32) {
    %c0_i32 = arith.constant 0 : i32
    %c0_i32_0 = arith.constant 0 : i32
    %c0_i32_1 = arith.constant 0 : i32
    return %c0_i32, %c0_i32_0 : i32, i32
  }
  func.func @transform_3(%arg0: i32) -> (i32, i32) {
    %c0_i32 = arith.constant 0 : i32
    %c0_i32_0 = arith.constant 0 : i32
    %c0_i32_1 = arith.constant 0 : i32
    return %c0_i32, %c0_i32_0 : i32, i32
  }
  func.func @transform_4(%arg0: i32) -> (i32, i32) {
    %c0_i32 = arith.constant 0 : i32
    %c0_i32_0 = arith.constant 0 : i32
    %c0_i32_1 = arith.constant 0 : i32
    return %c0_i32, %c0_i32_0 : i32, i32
  }
  func.func @transform_5(%arg0: i32) -> (i32, i32) {
    %c0_i32 = arith.constant 0 : i32
    %c0_i32_0 = arith.constant 0 : i32
    %c0_i32_1 = arith.constant 0 : i32
    return %c0_i32, %c0_i32_0 : i32, i32
  }
  func.func @transform_6(%arg0: i32) -> (i32, i32) {
    %c0_i32 = arith.constant 0 : i32
    %c0_i32_0 = arith.constant 0 : i32
    %c0_i32_1 = arith.constant 0 : i32
    return %c0_i32, %c0_i32_0 : i32, i32
  }
  func.func @transform_7(%arg0: i32) -> (i32, i32) {
    %c0_i32 = arith.constant 0 : i32
    %c0_i32_0 = arith.constant 0 : i32
    %c0_i32_1 = arith.constant 0 : i32
    return %c0_i32, %c0_i32_0 : i32, i32
  }
  func.func @transform_8(%arg0: i32) -> (i32, i32) {
    %c0_i32 = arith.constant 0 : i32
    %c0_i32_0 = arith.constant 0 : i32
    %c0_i32_1 = arith.constant 0 : i32
    return %c0_i32, %c0_i32_0 : i32, i32
  }
  func.func @transform_9(%arg0: i32) -> (i32, i32) {
    %c0_i32 = arith.constant 0 : i32
    %c0_i32_0 = arith.constant 0 : i32
    return %c0_i32, %arg0 : i32, i32
  }
}

</mosaic_0001>

<llo_original>
// kernel: tpu_custom_call.1
$region0: #{tpu_custom_call.1}
  #allocation0 [shape = 'u32[]', space=smem, size = 0x4, offset = 0x4, fixed_abs, tag = 'smem constant byte address 0x4 - core index']
  #allocation1 [shape = 'u32[72,128]{1,0:T(1,128)}', space=vmem, size = 0x9000, scoped, tag = 'internal scratch']
  #allocation2 [shape = 'f32[1,1]{1,0:T(1,128)S(1)}', space=vmem, size = 0x200, scoped, tag = 'scoped memory for tpu_custom_call.1']
  %s0 = inlined_call_operand.vmem [shape: f32[2,1024], index: 0, kind: input, shape index: {}]
  %s1 = inlined_call_operand.vmem [shape: f32[32,2], index: 1, kind: input, shape index: {}]
  %s2 = inlined_call_operand.vmem [shape: f32[32,1], index: 2, kind: input, shape index: {}]
  %s3 = inlined_call_operand.vmem [shape: f32[32,32], index: 3, kind: input, shape index: {}]
  %s4 = inlined_call_operand.vmem [shape: f32[32,1], index: 4, kind: input, shape index: {}]
  %s5 = inlined_call_operand.vmem [shape: f32[32,32], index: 5, kind: input, shape index: {}]
  %s6 = inlined_call_operand.vmem [shape: f32[32,1], index: 6, kind: input, shape index: {}]
  %s7 = inlined_call_operand.vmem [shape: f32[1,32], index: 7, kind: input, shape index: {}]
  %s8 = inlined_call_operand.<no memory space> [shape: f32[1,1], index: 8, kind: input, shape index: {}]
  %s9 = inlined_call_operand.hbm [shape: f32[1,1024], index: 9, kind: output, shape index: {}]
  %s10 = sld [smem:[#allocation0]]
  $region69: #{tpu_custom_call.1} parent=0
    _
  %s12 = ssub.s32 1, %s10
  %s13 = scalar_select 0, %s12, %s10
  %v14 = vstv %s8
  %15 = vst [vmem:[#allocation2] sm:$0x1] %v14
  $region1: #{tpu_custom_call.1} parent=0
    #allocation3 [shape = 'u8[4096]{0}', space=vmem, size = 0x1000, scoped, tag = 'output window, operand 0']
    #allocation4 [shape = 's32[2]{0}', space=sflag, size = 0x8, scoped, tag = 'scoped memory for tpu_custom_call.1']
    %16 = vsyncpa [#allocation4], 0
    %s17 = scalar_lea.sflag [#allocation4], 1
    %18 = vsyncpa %s17, 0
    loop: start=0, step=1, limit=4
    $region2: #{tpu_custom_call.1} parent=1 // loop_pre_header
      _
    $region3: #{tpu_custom_call.1} parent=1 // loop_header
      %s20 = sphi 0, %s24
      %p21 = scmp.ge.s32.totalorder %s20, 4
      %s30 = sphi 0, %s32
      %s33 = sphi 0, %s30
      %s34 = sphi 0, %s33
      %s50 = sphi 0, %s34
      %s54 = sphi 0, %s54
      %s56 = sphi 0, %s54
      %s57 = sphi 0, %s56
      %s71 = sphi 0, %s57
      %s75 = sphi 0, %s75
      %s77 = sphi 0, %s75
      %s78 = sphi 0, %s77
      %s92 = sphi 0, %s78
      %s96 = sphi 0, %s96
      %s98 = sphi 0, %s96
      %s99 = sphi 0, %s98
      %s113 = sphi 0, %s99
      %s117 = sphi 0, %s117
      %s119 = sphi 0, %s117
      %s120 = sphi 0, %s119
      %s134 = sphi 0, %s120
      %s138 = sphi 0, %s138
      %s140 = sphi 0, %s138
      %s141 = sphi 0, %s140
      %s155 = sphi 0, %s141
      %s159 = sphi 0, %s159
      %s161 = sphi 0, %s159
      %s162 = sphi 0, %s161
      %s176 = sphi 0, %s162
      %s180 = sphi 0, %s180
      %s182 = sphi 0, %s180
      %s183 = sphi 0, %s182
      %s197 = sphi 0, %s183
      %s201 = sphi 0, %s201
      %s203 = sphi 0, %s201
      %s204 = sphi 0, %s203
      %s218 = sphi 0, %s204
      %s224 = sphi 0, %s226
      %s227 = sphi 0, %s224
      %s228 = sphi 0, %s227
      %s244 = sphi 0, %s228
    $region4: #{tpu_custom_call.1} parent=1 // loop_header_branch
      %23 = sbr.rel (%p21) target = $region8
    $region5: #{tpu_custom_call.1} parent=1 // loop_body
      %s25 = ssub.s32 %s20, 1
      %s26 = ssub.s32 %s20, 2
      %s27 = sadd.s32 %s20, 1
      %s28 = ssub.s32 %s20, %s27
      %p29 = scmp.eq.s32.totalorder %s28, 0
      %s31 = sadd.s32 %s30, 1
      %s32 = scalar_select %p29, %s30, %s31
      %p35 = pneg %p29
      %p36 = scmp.eq.s32.totalorder %s20, 1
      %p37 = por %p35, %p36
      %p38 = scmp.ne.s32.totalorder %s30, %s33
      %p39 = scmp.eq.s32.totalorder %s20, 0
      %p40 = por %p38, %p39
      %p41 = scmp.ne.s32.totalorder %s30, %s33
      %p42 = scmp.eq.s32.totalorder %s25, 1
      %p43 = por %p41, %p42
      %p44 = scmp.ne.s32.totalorder %s33, %s34
      %p45 = scmp.eq.s32.totalorder %s25, 0
      %p46 = por %p44, %p45
      %p47 = scmp.ne.s32.totalorder %s33, %s34
      %p48 = scmp.eq.s32.totalorder %s26, 1
      %p49 = por %p47, %p48
      %p51 = scmp.ne.s32.totalorder %s34, %s50
      %p52 = scmp.eq.s32.totalorder %s26, 0
      %p53 = por %p51, %p52
      %s55 = sadd.s32 %s54, 1
      %p58 = scmp.eq.s32.totalorder %s20, 1
      %p59 = scmp.ne.s32.totalorder %s54, %s56
      %p60 = scmp.eq.s32.totalorder %s20, 0
      %p61 = por %p59, %p60
      %p62 = scmp.ne.s32.totalorder %s54, %s56
      %p63 = scmp.eq.s32.totalorder %s25, 1
      %p64 = por %p62, %p63
      %p65 = scmp.ne.s32.totalorder %s56, %s57
      %p66 = scmp.eq.s32.totalorder %s25, 0
      %p67 = por %p65, %p66
      %p68 = scmp.ne.s32.totalorder %s56, %s57
      %p69 = scmp.eq.s32.totalorder %s26, 1
      %p70 = por %p68, %p69
      %p72 = scmp.ne.s32.totalorder %s57, %s71
      %p73 = scmp.eq.s32.totalorder %s26, 0
      %p74 = por %p72, %p73
      %s76 = sadd.s32 %s75, 1
      %p79 = scmp.eq.s32.totalorder %s20, 1
      %p80 = scmp.ne.s32.totalorder %s75, %s77
      %p81 = scmp.eq.s32.totalorder %s20, 0
      %p82 = por %p80, %p81
      %p83 = scmp.ne.s32.totalorder %s75, %s77
      %p84 = scmp.eq.s32.totalorder %s25, 1
      %p85 = por %p83, %p84
      %p86 = scmp.ne.s32.totalorder %s77, %s78
      %p87 = scmp.eq.s32.totalorder %s25, 0
      %p88 = por %p86, %p87
      %p89 = scmp.ne.s32.totalorder %s77, %s78
      %p90 = scmp.eq.s32.totalorder %s26, 1
      %p91 = por %p89, %p90
      %p93 = scmp.ne.s32.totalorder %s78, %s92
      %p94 = scmp.eq.s32.totalorder %s26, 0
      %p95 = por %p93, %p94
      %s97 = sadd.s32 %s96, 1
      %p100 = scmp.eq.s32.totalorder %s20, 1
      %p101 = scmp.ne.s32.totalorder %s96, %s98
      %p102 = scmp.eq.s32.totalorder %s20, 0
      %p103 = por %p101, %p102
      %p104 = scmp.ne.s32.totalorder %s96, %s98
      %p105 = scmp.eq.s32.totalorder %s25, 1
      %p106 = por %p104, %p105
      %p107 = scmp.ne.s32.totalorder %s98, %s99
      %p108 = scmp.eq.s32.totalorder %s25, 0
      %p109 = por %p107, %p108
      %p110 = scmp.ne.s32.totalorder %s98, %s99
      %p111 = scmp.eq.s32.totalorder %s26, 1
      %p112 = por %p110, %p111
      %p114 = scmp.ne.s32.totalorder %s99, %s113
      %p115 = scmp.eq.s32.totalorder %s26, 0
      %p116 = por %p114, %p115
      %s118 = sadd.s32 %s117, 1
      %p121 = scmp.eq.s32.totalorder %s20, 1
      %p122 = scmp.ne.s32.totalorder %s117, %s119
      %p123 = scmp.eq.s32.totalorder %s20, 0
      %p124 = por %p122, %p123
      %p125 = scmp.ne.s32.totalorder %s117, %s119
      %p126 = scmp.eq.s32.totalorder %s25, 1
      %p127 = por %p125, %p126
      %p128 = scmp.ne.s32.totalorder %s119, %s120
      %p129 = scmp.eq.s32.totalorder %s25, 0
      %p130 = por %p128, %p129
      %p131 = scmp.ne.s32.totalorder %s119, %s120
      %p132 = scmp.eq.s32.totalorder %s26, 1
      %p133 = por %p131, %p132
      %p135 = scmp.ne.s32.totalorder %s120, %s134
      %p136 = scmp.eq.s32.totalorder %s26, 0
      %p137 = por %p135, %p136
      %s139 = sadd.s32 %s138, 1
      %p142 = scmp.eq.s32.totalorder %s20, 1
      %p143 = scmp.ne.s32.totalorder %s138, %s140
      %p144 = scmp.eq.s32.totalorder %s20, 0
      %p145 = por %p143, %p144
      %p146 = scmp.ne.s32.totalorder %s138, %s140
      %p147 = scmp.eq.s32.totalorder %s25, 1
      %p148 = por %p146, %p147
      %p149 = scmp.ne.s32.totalorder %s140, %s141
      %p150 = scmp.eq.s32.totalorder %s25, 0
      %p151 = por %p149, %p150
      %p152 = scmp.ne.s32.totalorder %s140, %s141
      %p153 = scmp.eq.s32.totalorder %s26, 1
      %p154 = por %p152, %p153
      %p156 = scmp.ne.s32.totalorder %s141, %s155
      %p157 = scmp.eq.s32.totalorder %s26, 0
      %p158 = por %p156, %p157
      %s160 = sadd.s32 %s159, 1
      %p163 = scmp.eq.s32.totalorder %s20, 1
      %p164 = scmp.ne.s32.totalorder %s159, %s161
      %p165 = scmp.eq.s32.totalorder %s20, 0
      %p166 = por %p164, %p165
      %p167 = scmp.ne.s32.totalorder %s159, %s161
      %p168 = scmp.eq.s32.totalorder %s25, 1
      %p169 = por %p167, %p168
      %p170 = scmp.ne.s32.totalorder %s161, %s162
      %p171 = scmp.eq.s32.totalorder %s25, 0
      %p172 = por %p170, %p171
      %p173 = scmp.ne.s32.totalorder %s161, %s162
      %p174 = scmp.eq.s32.totalorder %s26, 1
      %p175 = por %p173, %p174
      %p177 = scmp.ne.s32.totalorder %s162, %s176
      %p178 = scmp.eq.s32.totalorder %s26, 0
      %p179 = por %p177, %p178
      %s181 = sadd.s32 %s180, 1
      %p184 = scmp.eq.s32.totalorder %s20, 1
      %p185 = scmp.ne.s32.totalorder %s180, %s182
      %p186 = scmp.eq.s32.totalorder %s20, 0
      %p187 = por %p185, %p186
      %p188 = scmp.ne.s32.totalorder %s180, %s182
      %p189 = scmp.eq.s32.totalorder %s25, 1
      %p190 = por %p188, %p189
      %p191 = scmp.ne.s32.totalorder %s182, %s183
      %p192 = scmp.eq.s32.totalorder %s25, 0
      %p193 = por %p191, %p192
      %p194 = scmp.ne.s32.totalorder %s182, %s183
      %p195 = scmp.eq.s32.totalorder %s26, 1
      %p196 = por %p194, %p195
      %p198 = scmp.ne.s32.totalorder %s183, %s197
      %p199 = scmp.eq.s32.totalorder %s26, 0
      %p200 = por %p198, %p199
      %s202 = sadd.s32 %s201, 1
      %p205 = scmp.eq.s32.totalorder %s20, 1
      %p206 = scmp.ne.s32.totalorder %s201, %s203
      %p207 = scmp.eq.s32.totalorder %s20, 0
      %p208 = por %p206, %p207
      %p209 = scmp.ne.s32.totalorder %s201, %s203
      %p210 = scmp.eq.s32.totalorder %s25, 1
      %p211 = por %p209, %p210
      %p212 = scmp.ne.s32.totalorder %s203, %s204
      %p213 = scmp.eq.s32.totalorder %s25, 0
      %p214 = por %p212, %p213
      %p215 = scmp.ne.s32.totalorder %s203, %s204
      %p216 = scmp.eq.s32.totalorder %s26, 1
      %p217 = por %p215, %p216
      %p219 = scmp.ne.s32.totalorder %s204, %s218
      %p220 = scmp.eq.s32.totalorder %s26, 0
      %p221 = por %p219, %p220
      %s222 = ssub.s32 %s20, %s27
      %p223 = scmp.eq.s32.totalorder %s222, 0
      %s225 = sadd.s32 %s224, 1
      %s226 = scalar_select %p223, %s224, %s225
      %p229 = pneg %p223
      %p230 = scmp.eq.s32.totalorder %s20, 1
      %p231 = por %p229, %p230
      %p232 = scmp.ne.s32.totalorder %s224, %s227
      %p233 = scmp.eq.s32.totalorder %s20, 0
      %p234 = por %p232, %p233
      %p235 = scmp.ne.s32.totalorder %s224, %s227
      %p236 = scmp.eq.s32.totalorder %s25, 1
      %p237 = por %p235, %p236
      %p238 = scmp.ne.s32.totalorder %s227, %s228
      %p239 = scmp.eq.s32.totalorder %s25, 0
      %p240 = por %p238, %p239
      %p241 = scmp.ne.s32.totalorder %s227, %s228
      %p242 = scmp.eq.s32.totalorder %s26, 1
      %p243 = por %p241, %p242
      %p245 = scmp.ne.s32.totalorder %s228, %s244
      %p246 = scmp.eq.s32.totalorder %s26, 0
      %p247 = por %p245, %p246
      %p248 = scmp.le.s32.totalorder 1, %s20
      %p249 = scmp.lt.s32.totalorder %s20, 3
      %p250 = pnand %p248, %p249
      %p251 = pneg %p250
      // Predicated region
      $region9: #{tpu_custom_call.1} parent=5 // pred_check
        _
      $region10: #{tpu_custom_call.1} parent=5 // pred_check_branch
        %253 = sbr.rel (%p250) target = $region12
      $region11: #{tpu_custom_call.1} parent=5 // pred_region
        %s254 = ssub.s32 %s20, 1
        // Predicated region
        $region13: #{tpu_custom_call.1} parent=11 // pred_check
          %p255 = pneg %p67
        $region14: #{tpu_custom_call.1} parent=11 // pred_check_branch
          %257 = sbr.rel (%p255) target = $region16
        $region15: #{tpu_custom_call.1} parent=11 // pred_region
          _
        $region16: #{tpu_custom_call.1} parent=11 // pred_fallthru
          _
        // Predicated region
        $region17: #{tpu_custom_call.1} parent=11 // pred_check
          %p258 = pneg %p88
        $region18: #{tpu_custom_call.1} parent=11 // pred_check_branch
          %260 = sbr.rel (%p258) target = $region20
        $region19: #{tpu_custom_call.1} parent=11 // pred_region
          _
        $region20: #{tpu_custom_call.1} parent=11 // pred_fallthru
          _
        // Predicated region
        $region21: #{tpu_custom_call.1} parent=11 // pred_check
          %p261 = pneg %p109
        $region22: #{tpu_custom_call.1} parent=11 // pred_check_branch
          %263 = sbr.rel (%p261) target = $region24
        $region23: #{tpu_custom_call.1} parent=11 // pred_region
          _
        $region24: #{tpu_custom_call.1} parent=11 // pred_fallthru
          _
        // Predicated region
        $region25: #{tpu_custom_call.1} parent=11 // pred_check
          %p264 = pneg %p130
        $region26: #{tpu_custom_call.1} parent=11 // pred_check_branch
          %266 = sbr.rel (%p264) target = $region28
        $region27: #{tpu_custom_call.1} parent=11 // pred_region
          _
        $region28: #{tpu_custom_call.1} parent=11 // pred_fallthru
          _
        // Predicated region
        $region29: #{tpu_custom_call.1} parent=11 // pred_check
          %p267 = pneg %p151
        $region30: #{tpu_custom_call.1} parent=11 // pred_check_branch
          %269 = sbr.rel (%p267) target = $region32
        $region31: #{tpu_custom_call.1} parent=11 // pred_region
          _
        $region32: #{tpu_custom_call.1} parent=11 // pred_fallthru
          _
        // Predicated region
        $region33: #{tpu_custom_call.1} parent=11 // pred_check
          %p270 = pneg %p172
        $region34: #{tpu_custom_call.1} parent=11 // pred_check_branch
          %272 = sbr.rel (%p270) target = $region36
        $region35: #{tpu_custom_call.1} parent=11 // pred_region
          _
        $region36: #{tpu_custom_call.1} parent=11 // pred_fallthru
          _
        // Predicated region
        $region37: #{tpu_custom_call.1} parent=11 // pred_check
          %p273 = pneg %p193
        $region38: #{tpu_custom_call.1} parent=11 // pred_check_branch
          %275 = sbr.rel (%p273) target = $region40
        $region39: #{tpu_custom_call.1} parent=11 // pred_region
          _
        $region40: #{tpu_custom_call.1} parent=11 // pred_fallthru
          _
        // Predicated region
        $region41: #{tpu_custom_call.1} parent=11 // pred_check
          %p276 = pneg %p214
        $region42: #{tpu_custom_call.1} parent=11 // pred_check_branch
          %278 = sbr.rel (%p276) target = $region44
        $region43: #{tpu_custom_call.1} parent=11 // pred_region
          _
        $region44: #{tpu_custom_call.1} parent=11 // pred_fallthru
          _
      $region12: #{tpu_custom_call.1} parent=5 // pred_fallthru
        _
      %p279 = scmp.lt.s32.totalorder %s20, 2
      // Predicated region
      $region45: #{tpu_custom_call.1} parent=5 // pred_check
        %p280 = pneg %p279
      $region46: #{tpu_custom_call.1} parent=5 // pred_check_branch
        %282 = sbr.rel (%p280) target = $region48
      $region47: #{tpu_custom_call.1} parent=5 // pred_region
        // Predicated region
        $region49: #{tpu_custom_call.1} parent=47 // pred_check
          %p283 = pneg %p40
        $region50: #{tpu_custom_call.1} parent=47 // pred_check_branch
          %285 = sbr.rel (%p283) target = $region52
        $region51: #{tpu_custom_call.1} parent=47 // pred_region
          %s286 = smul.u32 4, %s20
          %p287 = scmp.lt.s32.totalorder %s286, 7
          %s288 = scalar_select %p287, %s286, 7
          %s289 = smul.addr %s288, 2
          %s290 = scalar_lea.vmem %s0, %s289
          %s291 = smul.u32 4, %s20
        $region52: #{tpu_custom_call.1} parent=47 // pred_fallthru
          _
      $region48: #{tpu_custom_call.1} parent=5 // pred_fallthru
        _
      %p292 = scmp.le.s32.totalorder 1, %s20
      %p293 = scmp.lt.s32.totalorder %s20, 3
      %p294 = pnand %p292, %p293
      %p295 = pneg %p294
      // Predicated region
      $region53: #{tpu_custom_call.1} parent=5 // pred_check
        _
      $region54: #{tpu_custom_call.1} parent=5 // pred_check_branch
        %297 = sbr.rel (%p294) target = $region56
      $region55: #{tpu_custom_call.1} parent=5 // pred_region
        %s298 = ssub.s32 %s20, 1
        %s299 = smul.u32 4, %s25
        %p300 = scmp.lt.s32.totalorder %s299, 7
        %s301 = scalar_select %p300, %s299, 7
        %s302 = smul.addr %s301, 2
        %s303 = scalar_lea.vmem %s0, %s302
        %p304 = pneg %p46
        %p305 = pneg %p43
        %p306 = pneg %p67
        %p307 = pneg %p64
        %p308 = pneg %p88
        %p309 = pneg %p85
        %p310 = pneg %p109
        %p311 = pneg %p106
        %p312 = pneg %p130
        %p313 = pneg %p127
        %p314 = pneg %p151
        %p315 = pneg %p148
        %p316 = pneg %p172
        %p317 = pneg %p169
        %p318 = pneg %p193
        %p319 = pneg %p190
        %p320 = pneg %p214
        %p321 = pneg %p211
        %p322 = pneg %p240
        %p323 = pneg %p237
        %s324 = sand.u32 %s227, 1
        %s325 = scalar_lea.sflag [#allocation4], %s324
        %s326 = sand.u32 %s227, 1
        %s327 = smul.addr %s326, 4
        %s328 = scalar_lea.vmem [#allocation3], %s327
        %s329 = smul.u32 4, %s25
        %p330 = scmp.lt.s32.totalorder %s329, 7
        %s331 = scalar_select %p330, %s329, 7
        %s332 = smul.addr %s331, 2
        %s333 = scalar_lea.vmem %s0, %s332
        %s334 = smul.u32 4, %s25
        %s335 = smul.u32 4, %s25
        %v336 = vld [vmem:[%s333] sm:$0xff]
        %v337 = vld [vmem:[%s1] sm:$0xff]
        %v338 = vld [vmem:[%s1 + $0x8] sm:$0xff]
        %v339 = vld [vmem:[%s1 + $0x10] sm:$0xff]
        %v340 = vld [vmem:[%s1 + $0x18] sm:$0xff]
        %342 = vset.pattern.permute.xlu0 0
        %343 = vperm.xlu0 %342, %v337
        %v344 = vpop.permute.xlu0 %343
        %347 = vset.pattern.permute.xlu0 0
        %348 = vperm.xlu0 %347, %v338
        %v349 = vpop.permute.xlu0 %348
        %352 = vset.pattern.permute.xlu0 0
        %353 = vperm.xlu0 %352, %v339
        %v354 = vpop.permute.xlu0 %353
        %357 = vset.pattern.permute.xlu0 0
        %358 = vperm.xlu0 %357, %v340
        %v359 = vpop.permute.xlu0 %358
        %v362 = vperm.slane %v336, 0
        %v363 = vperm.slane %v336, 2
        %v364 = vperm.slane %v336, 4
        %v365 = vperm.slane %v336, 6
        %v370 = vperm.slane %v362, 0
        %v371 = vperm.slane %v363, 0
        %v372 = vperm.slane %v364, 0
        %v373 = vperm.slane %v365, 0
        %v374 = vmul.f32 %v344, %v370
        %v375 = vmul.f32 %v344, %v371
        %v376 = vmul.f32 %v344, %v372
        %v377 = vmul.f32 %v344, %v373
        %v378 = vmul.f32 %v349, %v370
        %v379 = vmul.f32 %v349, %v371
        %v380 = vmul.f32 %v349, %v372
        %v381 = vmul.f32 %v349, %v373
        %v382 = vmul.f32 %v354, %v370
        %v383 = vmul.f32 %v354, %v371
        %v384 = vmul.f32 %v354, %v372
        %v385 = vmul.f32 %v354, %v373
        %v386 = vmul.f32 %v359, %v370
        %v387 = vmul.f32 %v359, %v371
        %v388 = vmul.f32 %v359, %v372
        %v389 = vmul.f32 %v359, %v373
        %390 = vset.pattern.permute.xlu0 1
        %391 = vperm.xlu0 %390, %v337
        %v392 = vpop.permute.xlu0 %391
        %394 = vset.pattern.permute.xlu0 1
        %395 = vperm.xlu0 %394, %v338
        %v396 = vpop.permute.xlu0 %395
        %398 = vset.pattern.permute.xlu0 1
        %399 = vperm.xlu0 %398, %v339
        %v400 = vpop.permute.xlu0 %399
        %402 = vset.pattern.permute.xlu0 1
        %403 = vperm.xlu0 %402, %v340
        %v404 = vpop.permute.xlu0 %403
        %v406 = vperm.slane %v336, 1
        %v407 = vperm.slane %v336, 3
        %v408 = vperm.slane %v336, 5
        %v409 = vperm.slane %v336, 7
        %v414 = vperm.slane %v406, 1
        %v415 = vperm.slane %v407, 1
        %v416 = vperm.slane %v408, 1
        %v417 = vperm.slane %v409, 1
        %v418 = vmul.f32 %v392, %v414
        %v419 = vmul.f32 %v392, %v415
        %v420 = vmul.f32 %v392, %v416
        %v421 = vmul.f32 %v392, %v417
        %v422 = vmul.f32 %v396, %v414
        %v423 = vmul.f32 %v396, %v415
        %v424 = vmul.f32 %v396, %v416
        %v425 = vmul.f32 %v396, %v417
        %v426 = vmul.f32 %v400, %v414
        %v427 = vmul.f32 %v400, %v415
        %v428 = vmul.f32 %v400, %v416
        %v429 = vmul.f32 %v400, %v417
        %v430 = vmul.f32 %v404, %v414
        %v431 = vmul.f32 %v404, %v415
        %v432 = vmul.f32 %v404, %v416
        %v433 = vmul.f32 %v404, %v417
        %v434 = vadd.f32 %v374, %v418
        %v435 = vadd.f32 %v375, %v419
        %v436 = vadd.f32 %v376, %v420
        %v437 = vadd.f32 %v377, %v421
        %v438 = vadd.f32 %v378, %v422
        %v439 = vadd.f32 %v379, %v423
        %v440 = vadd.f32 %v380, %v424
        %v441 = vadd.f32 %v381, %v425
        %v442 = vadd.f32 %v382, %v426
        %v443 = vadd.f32 %v383, %v427
        %v444 = vadd.f32 %v384, %v428
        %v445 = vadd.f32 %v385, %v429
        %v446 = vadd.f32 %v386, %v430
        %v447 = vadd.f32 %v387, %v431
        %v448 = vadd.f32 %v388, %v432
        %v449 = vadd.f32 %v389, %v433
        %v450 = vld [vmem:[%s2] sm:$0xff]
        %v451 = vld [vmem:[%s2 + $0x8] sm:$0xff]
        %v452 = vld [vmem:[%s2 + $0x10] sm:$0xff]
        %v453 = vld [vmem:[%s2 + $0x18] sm:$0xff]
        %455 = vset.pattern.permute.xlu0 0
        %456 = vperm.xlu0 %455, %v450
        %v457 = vpop.permute.xlu0 %456
        %460 = vset.pattern.permute.xlu0 0
        %461 = vperm.xlu0 %460, %v451
        %v462 = vpop.permute.xlu0 %461
        %465 = vset.pattern.permute.xlu0 0
        %466 = vperm.xlu0 %465, %v452
        %v467 = vpop.permute.xlu0 %466
        %470 = vset.pattern.permute.xlu0 0
        %471 = vperm.xlu0 %470, %v453
        %v472 = vpop.permute.xlu0 %471
        %v474 = vadd.f32 %v434, %v457
        %v475 = vadd.f32 %v435, %v457
        %v476 = vadd.f32 %v436, %v457
        %v477 = vadd.f32 %v437, %v457
        %v478 = vadd.f32 %v438, %v462
        %v479 = vadd.f32 %v439, %v462
        %v480 = vadd.f32 %v440, %v462
        %v481 = vadd.f32 %v441, %v462
        %v482 = vadd.f32 %v442, %v467
        %v483 = vadd.f32 %v443, %v467
        %v484 = vadd.f32 %v444, %v467
        %v485 = vadd.f32 %v445, %v467
        %v486 = vadd.f32 %v446, %v472
        %v487 = vadd.f32 %v447, %v472
        %v488 = vadd.f32 %v448, %v472
        %v489 = vadd.f32 %v449, %v472
        %v490 = vtanh.pop %v474
        %v491 = vtanh.pop %v475
        %v492 = vtanh.pop %v476
        %v493 = vtanh.pop %v477
        %v494 = vtanh.pop %v478
        %v495 = vtanh.pop %v479
        %v496 = vtanh.pop %v480
        %v497 = vtanh.pop %v481
        %v498 = vtanh.pop %v482
        %v499 = vtanh.pop %v483
        %v500 = vtanh.pop %v484
        %v501 = vtanh.pop %v485
        %v502 = vtanh.pop %v486
        %v503 = vtanh.pop %v487
        %v504 = vtanh.pop %v488
        %v505 = vtanh.pop %v489
        %v506 = vld [vmem:[%s3] sm:$0xff]
        %v507 = vld [vmem:[%s3 + $0x8] sm:$0xff]
        %v508 = vld [vmem:[%s3 + $0x10] sm:$0xff]
        %v509 = vld [vmem:[%s3 + $0x18] sm:$0xff]
        %v510 = vld [vmem:[%s4] sm:$0xff]
        %v511 = vld [vmem:[%s4 + $0x8] sm:$0xff]
        %v512 = vld [vmem:[%s4 + $0x10] sm:$0xff]
        %v513 = vld [vmem:[%s4 + $0x18] sm:$0xff]
        %515 = vset.pattern.permute.xlu0 0
        %516 = vperm.xlu0 %515, %v510
        %v517 = vpop.permute.xlu0 %516
        %520 = vset.pattern.permute.xlu0 0
        %521 = vperm.xlu0 %520, %v511
        %v522 = vpop.permute.xlu0 %521
        %525 = vset.pattern.permute.xlu0 0
        %526 = vperm.xlu0 %525, %v512
        %v527 = vpop.permute.xlu0 %526
        %530 = vset.pattern.permute.xlu0 0
        %531 = vperm.xlu0 %530, %v513
        %v532 = vpop.permute.xlu0 %531
        %vm534 = vcmask 261120
        %v536 = vsel %vm534, %v506, 0
        %v539 = vsel %vm534, %v507, 0
        %v542 = vsel %vm534, %v508, 0
        %v545 = vsel %vm534, %v509, 0
        %547 = vmatpush.msra.mxu0 0.0
        %548 = vmatpush.msra.mxu0 0.0
        %549 = vmatpush.msra.mxu0 0.0
        %550 = vmatpush.msra.mxu0 0.0
        %551 = vmatpush.msra.mxu0 0.0
        %552 = vmatpush.msra.mxu0 0.0
        %553 = vmatpush.msra.mxu0 0.0
        %554 = vmatpush.msra.mxu0 0.0
        %555 = vmatpush.msra.mxu0 0.0
        %556 = vmatpush.msra.mxu0 0.0
        %557 = vmatpush.msra.mxu0 0.0
        %558 = vmatpush.msra.mxu0 0.0
        %559 = vmatpush.msra.mxu0 %v502
        %560 = vmatpush.msra.mxu0 %v498
        %561 = vmatpush.msra.mxu0 %v494
        %562 = vmatpush.msra.mxu0 %v490
        %563 = vmatmul.f32.gmra.mxu0 %v536
        %v564 = vpop.f32.mrf.mxu0
        %v565 = vadd.f32 %v517, %v564
        %566 = vmatmul.f32.gmra.mxu0 %v539
        %v567 = vpop.f32.mrf.mxu0
        %v568 = vadd.f32 %v522, %v567
        %569 = vmatmul.f32.gmra.mxu0 %v542
        %v570 = vpop.f32.mrf.mxu0
        %v571 = vadd.f32 %v527, %v570
        %572 = vmatmul.f32.gmra.mxu0 %v545
        %v573 = vpop.f32.mrf.mxu0
        %v574 = vadd.f32 %v532, %v573
        %575 = vdwg.mxu0
        %576 = vmatpush.msra.mxu0 0.0
        %577 = vmatpush.msra.mxu0 0.0
        %578 = vmatpush.msra.mxu0 0.0
        %579 = vmatpush.msra.mxu0 0.0
        %580 = vmatpush.msra.mxu0 0.0
        %581 = vmatpush.msra.mxu0 0.0
        %582 = vmatpush.msra.mxu0 0.0
        %583 = vmatpush.msra.mxu0 0.0
        %584 = vmatpush.msra.mxu0 0.0
        %585 = vmatpush.msra.mxu0 0.0
        %586 = vmatpush.msra.mxu0 0.0
        %587 = vmatpush.msra.mxu0 0.0
        %588 = vmatpush.msra.mxu0 %v503
        %589 = vmatpush.msra.mxu0 %v499
        %590 = vmatpush.msra.mxu0 %v495
        %591 = vmatpush.msra.mxu0 %v491
        %592 = vmatmul.f32.gmra.mxu0 %v536
        %v593 = vpop.f32.mrf.mxu0
        %v594 = vadd.f32 %v517, %v593
        %595 = vmatmul.f32.gmra.mxu0 %v539
        %v596 = vpop.f32.mrf.mxu0
        %v597 = vadd.f32 %v522, %v596
        %598 = vmatmul.f32.gmra.mxu0 %v542
        %v599 = vpop.f32.mrf.mxu0
        %v600 = vadd.f32 %v527, %v599
        %601 = vmatmul.f32.gmra.mxu0 %v545
        %v602 = vpop.f32.mrf.mxu0
        %v603 = vadd.f32 %v532, %v602
        %604 = vdwg.mxu0
        %605 = vmatpush.msra.mxu0 0.0
        %606 = vmatpush.msra.mxu0 0.0
        %607 = vmatpush.msra.mxu0 0.0
        %608 = vmatpush.msra.mxu0 0.0
        %609 = vmatpush.msra.mxu0 0.0
        %610 = vmatpush.msra.mxu0 0.0
        %611 = vmatpush.msra.mxu0 0.0
        %612 = vmatpush.msra.mxu0 0.0
        %613 = vmatpush.msra.mxu0 0.0
        %614 = vmatpush.msra.mxu0 0.0
        %615 = vmatpush.msra.mxu0 0.0
        %616 = vmatpush.msra.mxu0 0.0
        %617 = vmatpush.msra.mxu0 %v504
        %618 = vmatpush.msra.mxu0 %v500
        %619 = vmatpush.msra.mxu0 %v496
        %620 = vmatpush.msra.mxu0 %v492
        %621 = vmatmul.f32.gmra.mxu0 %v536
        %v622 = vpop.f32.mrf.mxu0
        %v623 = vadd.f32 %v517, %v622
        %624 = vmatmul.f32.gmra.mxu0 %v539
        %v625 = vpop.f32.mrf.mxu0
        %v626 = vadd.f32 %v522, %v625
        %627 = vmatmul.f32.gmra.mxu0 %v542
        %v628 = vpop.f32.mrf.mxu0
        %v629 = vadd.f32 %v527, %v628
        %630 = vmatmul.f32.gmra.mxu0 %v545
        %v631 = vpop.f32.mrf.mxu0
        %v632 = vadd.f32 %v532, %v631
        %633 = vdwg.mxu0
        %634 = vmatpush.msra.mxu0 0.0
        %635 = vmatpush.msra.mxu0 0.0
        %636 = vmatpush.msra.mxu0 0.0
        %637 = vmatpush.msra.mxu0 0.0
        %638 = vmatpush.msra.mxu0 0.0
        %639 = vmatpush.msra.mxu0 0.0
        %640 = vmatpush.msra.mxu0 0.0
        %641 = vmatpush.msra.mxu0 0.0
        %642 = vmatpush.msra.mxu0 0.0
        %643 = vmatpush.msra.mxu0 0.0
        %644 = vmatpush.msra.mxu0 0.0
        %645 = vmatpush.msra.mxu0 0.0
        %646 = vmatpush.msra.mxu0 %v505
        %647 = vmatpush.msra.mxu0 %v501
        %648 = vmatpush.msra.mxu0 %v497
        %649 = vmatpush.msra.mxu0 %v493
        %650 = vmatmul.f32.gmra.mxu0 %v536
        %v651 = vpop.f32.mrf.mxu0
        %v652 = vadd.f32 %v517, %v651
        %653 = vmatmul.f32.gmra.mxu0 %v539
        %v654 = vpop.f32.mrf.mxu0
        %v655 = vadd.f32 %v522, %v654
        %656 = vmatmul.f32.gmra.mxu0 %v542
        %v657 = vpop.f32.mrf.mxu0
        %v658 = vadd.f32 %v527, %v657
        %659 = vmatmul.f32.gmra.mxu0 %v545
        %v660 = vpop.f32.mrf.mxu0
        %v661 = vadd.f32 %v532, %v660
        %662 = vdwg.mxu0
        %v663 = vtanh.pop %v565
        %v664 = vtanh.pop %v594
        %v665 = vtanh.pop %v623
        %v666 = vtanh.pop %v652
        %v667 = vtanh.pop %v568
        %v668 = vtanh.pop %v597
        %v669 = vtanh.pop %v626
        %v670 = vtanh.pop %v655
        %v671 = vtanh.pop %v571
        %v672 = vtanh.pop %v600
        %v673 = vtanh.pop %v629
        %v674 = vtanh.pop %v658
        %v675 = vtanh.pop %v574
        %v676 = vtanh.pop %v603
        %v677 = vtanh.pop %v632
        %v678 = vtanh.pop %v661
        %v679 = vld [vmem:[%s5] sm:$0xff]
        %v680 = vld [vmem:[%s5 + $0x8] sm:$0xff]
        %v681 = vld [vmem:[%s5 + $0x10] sm:$0xff]
        %v682 = vld [vmem:[%s5 + $0x18] sm:$0xff]
        %v683 = vld [vmem:[%s6] sm:$0xff]
        %v684 = vld [vmem:[%s6 + $0x8] sm:$0xff]
        %v685 = vld [vmem:[%s6 + $0x10] sm:$0xff]
        %v686 = vld [vmem:[%s6 + $0x18] sm:$0xff]
        %688 = vset.pattern.permute.xlu0 0
        %689 = vperm.xlu0 %688, %v683
        %v690 = vpop.permute.xlu0 %689
        %693 = vset.pattern.permute.xlu0 0
        %694 = vperm.xlu0 %693, %v684
        %v695 = vpop.permute.xlu0 %694
        %698 = vset.pattern.permute.xlu0 0
        %699 = vperm.xlu0 %698, %v685
        %v700 = vpop.permute.xlu0 %699
        %703 = vset.pattern.permute.xlu0 0
        %704 = vperm.xlu0 %703, %v686
        %v705 = vpop.permute.xlu0 %704
        %v708 = vsel %vm534, %v679, 0
        %v711 = vsel %vm534, %v680, 0
        %v714 = vsel %vm534, %v681, 0
        %v717 = vsel %vm534, %v682, 0
        %719 = vmatpush.msra.mxu0 0.0
        %720 = vmatpush.msra.mxu0 0.0
        %721 = vmatpush.msra.mxu0 0.0
        %722 = vmatpush.msra.mxu0 0.0
        %723 = vmatpush.msra.mxu0 0.0
        %724 = vmatpush.msra.mxu0 0.0
        %725 = vmatpush.msra.mxu0 0.0
        %726 = vmatpush.msra.mxu0 0.0
        %727 = vmatpush.msra.mxu0 0.0
        %728 = vmatpush.msra.mxu0 0.0
        %729 = vmatpush.msra.mxu0 0.0
        %730 = vmatpush.msra.mxu0 0.0
        %731 = vmatpush.msra.mxu0 %v675
        %732 = vmatpush.msra.mxu0 %v671
        %733 = vmatpush.msra.mxu0 %v667
        %734 = vmatpush.msra.mxu0 %v663
        %735 = vmatmul.f32.gmra.mxu0 %v708
        %v736 = vpop.f32.mrf.mxu0
        %v737 = vadd.f32 %v690, %v736
        %738 = vmatmul.f32.gmra.mxu0 %v711
        %v739 = vpop.f32.mrf.mxu0
        %v740 = vadd.f32 %v695, %v739
        %741 = vmatmul.f32.gmra.mxu0 %v714
        %v742 = vpop.f32.mrf.mxu0
        %v743 = vadd.f32 %v700, %v742
        %744 = vmatmul.f32.gmra.mxu0 %v717
        %v745 = vpop.f32.mrf.mxu0
        %v746 = vadd.f32 %v705, %v745
        %747 = vdwg.mxu0
        %748 = vmatpush.msra.mxu0 0.0
        %749 = vmatpush.msra.mxu0 0.0
        %750 = vmatpush.msra.mxu0 0.0
        %751 = vmatpush.msra.mxu0 0.0
        %752 = vmatpush.msra.mxu0 0.0
        %753 = vmatpush.msra.mxu0 0.0
        %754 = vmatpush.msra.mxu0 0.0
        %755 = vmatpush.msra.mxu0 0.0
        %756 = vmatpush.msra.mxu0 0.0
        %757 = vmatpush.msra.mxu0 0.0
        %758 = vmatpush.msra.mxu0 0.0
        %759 = vmatpush.msra.mxu0 0.0
        %760 = vmatpush.msra.mxu0 %v676
        %761 = vmatpush.msra.mxu0 %v672
        %762 = vmatpush.msra.mxu0 %v668
        %763 = vmatpush.msra.mxu0 %v664
        %764 = vmatmul.f32.gmra.mxu0 %v708
        %v765 = vpop.f32.mrf.mxu0
        %v766 = vadd.f32 %v690, %v765
        %767 = vmatmul.f32.gmra.mxu0 %v711
        %v768 = vpop.f32.mrf.mxu0
        %v769 = vadd.f32 %v695, %v768
        %770 = vmatmul.f32.gmra.mxu0 %v714
        %v771 = vpop.f32.mrf.mxu0
        %v772 = vadd.f32 %v700, %v771
        %773 = vmatmul.f32.gmra.mxu0 %v717
        %v774 = vpop.f32.mrf.mxu0
        %v775 = vadd.f32 %v705, %v774
        %776 = vdwg.mxu0
        %777 = vmatpush.msra.mxu0 0.0
        %778 = vmatpush.msra.mxu0 0.0
        %779 = vmatpush.msra.mxu0 0.0
        %780 = vmatpush.msra.mxu0 0.0
        %781 = vmatpush.msra.mxu0 0.0
        %782 = vmatpush.msra.mxu0 0.0
        %783 = vmatpush.msra.mxu0 0.0
        %784 = vmatpush.msra.mxu0 0.0
        %785 = vmatpush.msra.mxu0 0.0
        %786 = vmatpush.msra.mxu0 0.0
        %787 = vmatpush.msra.mxu0 0.0
        %788 = vmatpush.msra.mxu0 0.0
        %789 = vmatpush.msra.mxu0 %v677
        %790 = vmatpush.msra.mxu0 %v673
        %791 = vmatpush.msra.mxu0 %v669
        %792 = vmatpush.msra.mxu0 %v665
        %793 = vmatmul.f32.gmra.mxu0 %v708
        %v794 = vpop.f32.mrf.mxu0
        %v795 = vadd.f32 %v690, %v794
        %796 = vmatmul.f32.gmra.mxu0 %v711
        %v797 = vpop.f32.mrf.mxu0
        %v798 = vadd.f32 %v695, %v797
        %799 = vmatmul.f32.gmra.mxu0 %v714
        %v800 = vpop.f32.mrf.mxu0
        %v801 = vadd.f32 %v700, %v800
        %802 = vmatmul.f32.gmra.mxu0 %v717
        %v803 = vpop.f32.mrf.mxu0
        %v804 = vadd.f32 %v705, %v803
        %805 = vdwg.mxu0
        %806 = vmatpush.msra.mxu0 0.0
        %807 = vmatpush.msra.mxu0 0.0
        %808 = vmatpush.msra.mxu0 0.0
        %809 = vmatpush.msra.mxu0 0.0
        %810 = vmatpush.msra.mxu0 0.0
        %811 = vmatpush.msra.mxu0 0.0
        %812 = vmatpush.msra.mxu0 0.0
        %813 = vmatpush.msra.mxu0 0.0
        %814 = vmatpush.msra.mxu0 0.0
        %815 = vmatpush.msra.mxu0 0.0
        %816 = vmatpush.msra.mxu0 0.0
        %817 = vmatpush.msra.mxu0 0.0
        %818 = vmatpush.msra.mxu0 %v678
        %819 = vmatpush.msra.mxu0 %v674
        %820 = vmatpush.msra.mxu0 %v670
        %821 = vmatpush.msra.mxu0 %v666
        %822 = vmatmul.f32.gmra.mxu0 %v708
        %v823 = vpop.f32.mrf.mxu0
        %v824 = vadd.f32 %v690, %v823
        %825 = vmatmul.f32.gmra.mxu0 %v711
        %v826 = vpop.f32.mrf.mxu0
        %v827 = vadd.f32 %v695, %v826
        %828 = vmatmul.f32.gmra.mxu0 %v714
        %v829 = vpop.f32.mrf.mxu0
        %v830 = vadd.f32 %v700, %v829
        %831 = vmatmul.f32.gmra.mxu0 %v717
        %v832 = vpop.f32.mrf.mxu0
        %v833 = vadd.f32 %v705, %v832
        %834 = vdwg.mxu0
        %v835 = vtanh.pop %v737
        %v836 = vtanh.pop %v766
        %v837 = vtanh.pop %v795
        %v838 = vtanh.pop %v824
        %v839 = vtanh.pop %v740
        %v840 = vtanh.pop %v769
        %v841 = vtanh.pop %v798
        %v842 = vtanh.pop %v827
        %v843 = vtanh.pop %v743
        %v844 = vtanh.pop %v772
        %v845 = vtanh.pop %v801
        %v846 = vtanh.pop %v830
        %v847 = vtanh.pop %v746
        %v848 = vtanh.pop %v775
        %v849 = vtanh.pop %v804
        %v850 = vtanh.pop %v833
        %v851 = vld [vmem:[%s7] sm:$0x1]
        %v852 = vld [vmem:[#allocation2] sm:$0x1]
        %854 = vset.pattern.permute.xlu0 0
        %855 = vperm.xlu0 %854, %v852
        %v856 = vpop.permute.xlu0 %855
        %v858 = vperm.slane %v856, 0
        %v860 = vsel %vm534, %v851, 0
        %862 = vmatpush.msra.mxu0 0.0
        %863 = vmatpush.msra.mxu0 0.0
        %864 = vmatpush.msra.mxu0 0.0
        %865 = vmatpush.msra.mxu0 0.0
        %866 = vmatpush.msra.mxu0 0.0
        %867 = vmatpush.msra.mxu0 0.0
        %868 = vmatpush.msra.mxu0 0.0
        %869 = vmatpush.msra.mxu0 0.0
        %870 = vmatpush.msra.mxu0 0.0
        %871 = vmatpush.msra.mxu0 0.0
        %872 = vmatpush.msra.mxu0 0.0
        %873 = vmatpush.msra.mxu0 0.0
        %874 = vmatpush.msra.mxu0 %v847
        %875 = vmatpush.msra.mxu0 %v843
        %876 = vmatpush.msra.mxu0 %v839
        %877 = vmatpush.msra.mxu0 %v835
        %878 = vmatmul.f32.gmra.mxu0 %v860
        %v879 = vpop.f32.mrf.mxu0
        %v880 = vadd.f32 %v858, %v879
        %881 = vdwg.mxu0
        %882 = vmatpush.msra.mxu0 0.0
        %883 = vmatpush.msra.mxu0 0.0
        %884 = vmatpush.msra.mxu0 0.0
        %885 = vmatpush.msra.mxu0 0.0
        %886 = vmatpush.msra.mxu0 0.0
        %887 = vmatpush.msra.mxu0 0.0
        %888 = vmatpush.msra.mxu0 0.0
        %889 = vmatpush.msra.mxu0 0.0
        %890 = vmatpush.msra.mxu0 0.0
        %891 = vmatpush.msra.mxu0 0.0
        %892 = vmatpush.msra.mxu0 0.0
        %893 = vmatpush.msra.mxu0 0.0
        %894 = vmatpush.msra.mxu0 %v848
        %895 = vmatpush.msra.mxu0 %v844
        %896 = vmatpush.msra.mxu0 %v840
        %897 = vmatpush.msra.mxu0 %v836
        %898 = vmatmul.f32.gmra.mxu0 %v860
        %v899 = vpop.f32.mrf.mxu0
        %v900 = vadd.f32 %v858, %v899
        %901 = vdwg.mxu0
        %902 = vmatpush.msra.mxu0 0.0
        %903 = vmatpush.msra.mxu0 0.0
        %904 = vmatpush.msra.mxu0 0.0
        %905 = vmatpush.msra.mxu0 0.0
        %906 = vmatpush.msra.mxu0 0.0
        %907 = vmatpush.msra.mxu0 0.0
        %908 = vmatpush.msra.mxu0 0.0
        %909 = vmatpush.msra.mxu0 0.0
        %910 = vmatpush.msra.mxu0 0.0
        %911 = vmatpush.msra.mxu0 0.0
        %912 = vmatpush.msra.mxu0 0.0
        %913 = vmatpush.msra.mxu0 0.0
        %914 = vmatpush.msra.mxu0 %v849
        %915 = vmatpush.msra.mxu0 %v845
        %916 = vmatpush.msra.mxu0 %v841
        %917 = vmatpush.msra.mxu0 %v837
        %918 = vmatmul.f32.gmra.mxu0 %v860
        %v919 = vpop.f32.mrf.mxu0
        %v920 = vadd.f32 %v858, %v919
        %921 = vdwg.mxu0
        %922 = vmatpush.msra.mxu0 0.0
        %923 = vmatpush.msra.mxu0 0.0
        %924 = vmatpush.msra.mxu0 0.0
        %925 = vmatpush.msra.mxu0 0.0
        %926 = vmatpush.msra.mxu0 0.0
        %927 = vmatpush.msra.mxu0 0.0
        %928 = vmatpush.msra.mxu0 0.0
        %929 = vmatpush.msra.mxu0 0.0
        %930 = vmatpush.msra.mxu0 0.0
        %931 = vmatpush.msra.mxu0 0.0
        %932 = vmatpush.msra.mxu0 0.0
        %933 = vmatpush.msra.mxu0 0.0
        %934 = vmatpush.msra.mxu0 %v850
        %935 = vmatpush.msra.mxu0 %v846
        %936 = vmatpush.msra.mxu0 %v842
        %937 = vmatpush.msra.mxu0 %v838
        %938 = vmatmul.f32.gmra.mxu0 %v860
        %v939 = vpop.f32.mrf.mxu0
        %v940 = vadd.f32 %v858, %v939
        %941 = vdwg.mxu0
        %v946 = vrot.slane %v900, 7
        %v947 = vrot.slane %v920, 6
        %v948 = vrot.slane %v940, 5
        %vm949 = vcmask 1040384
        %v950 = vsel %vm949, %v880, %v946
        %vm951 = vcmask 1042434
        %v952 = vsel %vm951, %v947, %v948
        %vm953 = vcmask 1041408
        %v954 = vsel %vm953, %v950, %v952
        %v956 = vlaneseq
        %vm957 = vcmp.ge.s32.totalorder %v956, 0
        %vm958 = vcmp.lt.s32.totalorder %v956, 512
        %vm959 = vmand %vm957, %vm958
        %960 = vst.msk [vmem:[%s328] sm:$0xf] %vm959, %v954
        %s961 = sand.u32 %s227, 1
        %s962 = scalar_lea.sflag [#allocation4], %s961
        %s963 = sand.u32 %s227, 1
        %s964 = smul.addr %s963, 4
        %s965 = scalar_lea.vmem [#allocation3], %s964
        // Predicated region
        $region57: #{tpu_custom_call.1} parent=55 // pred_check
          %p966 = pneg %p237
        $region58: #{tpu_custom_call.1} parent=55 // pred_check_branch
          %968 = sbr.rel (%p966) target = $region60
        $region59: #{tpu_custom_call.1} parent=55 // pred_region
          %s969 = smul.u32 4, %s25
          %971 = vsyncadd %s962, 0
          %s972 = scalar_lea.hbm %s9, %s969
          %s974 = sshll.u32 %s965, 4
          %s975 = int_to_ptr.vmem [resolvable:$true] %s974
          %s976 = sshll.u32 %s972, 4
          %s977 = int_to_ptr.hbm [resolvable:$true] %s976
          %979 = dma.vmem_to_hbm [thread:$0]  %s975, 64, %s977, %s962
        $region60: #{tpu_custom_call.1} parent=55 // pred_fallthru
          _
      $region56: #{tpu_custom_call.1} parent=5 // pred_fallthru
        _
      %p980 = scmp.le.s32.totalorder 2, %s20
      // Predicated region
      $region61: #{tpu_custom_call.1} parent=5 // pred_check
        %p981 = pneg %p980
      $region62: #{tpu_custom_call.1} parent=5 // pred_check_branch
        %983 = sbr.rel (%p981) target = $region64
      $region63: #{tpu_custom_call.1} parent=5 // pred_region
        %s984 = ssub.s32 %s20, 2
        // Predicated region
        $region65: #{tpu_custom_call.1} parent=63 // pred_check
          %p985 = pneg %p243
        $region66: #{tpu_custom_call.1} parent=63 // pred_check_branch
          %987 = sbr.rel (%p985) target = $region68
        $region67: #{tpu_custom_call.1} parent=63 // pred_region
          %s988 = sand.u32 %s228, 1
          %s989 = scalar_lea.sflag [#allocation4], %s988
          %s990 = sand.u32 %s228, 1
          %s991 = smul.addr %s990, 4
          %s992 = scalar_lea.vmem [#allocation3], %s991
          %994 = dma.done %s989, 64
        $region68: #{tpu_custom_call.1} parent=63 // pred_fallthru
          _
      $region64: #{tpu_custom_call.1} parent=5 // pred_fallthru
        _
    $region6: #{tpu_custom_call.1} parent=1 // loop_footer
      %s24 = sadd.s32 1, %s20
    $region7: #{tpu_custom_call.1} parent=1 // loop_footer_branch
      %19 = sbr.rel target = $region3
    $region8: #{tpu_custom_call.1} parent=1 // loop_exit
      _
    %995 = vsyncpa [#allocation4], 1
    %s996 = scalar_lea.sflag [#allocation4], 1
    %997 = vsyncpa %s996, 1

</llo_original>
